<compile_context>
chip_gen: v6e
topology: v6e:2x2x1
jax: 0.10.0
libtpu: 0.0.40
codegen_flags: <defaults>
</compile_context>

<pallas_src>
import functools

import jax
import jax.numpy as jnp
from jax.experimental import pallas as pl
from jax.experimental.pallas import tpu as pltpu

TM_MAX = 1024  # upper bound on GEMM row-tile per grid step


def _round_up(x, m):
    return (x + m - 1) // m * m


def _choose_tm(M):
    """Per-layer row tile: cover tiny layers in one step, keep >=2 steps big."""
    if M <= 256:
        return _round_up(M, 16)
    steps = max(2, -(-M // TM_MAX))
    return _round_up(-(-M // steps), 16)


# ----------------------------- Pallas kernel --------------------------------
def _gemm_bias_kernel(x_ref, w_ref, shift_ref, o_ref, *, relu):
    """out = relu?( (x @ w) + shift ) ; shift broadcast over rows, f32 math."""
    acc = jnp.dot(x_ref[...], w_ref[...], preferred_element_type=jnp.float32)
    acc = acc + shift_ref[...]
    if relu:
        acc = jnp.maximum(acc, 0.0)
    o_ref[...] = acc.astype(o_ref.dtype)


def _pallas_gemm_bias(x2d, w_mat, shift, relu):
    """x2d: (M, K) f32, w_mat: (K, Cout) f32, shift: (Cout,) -> (M, Cout) f32.

    Casts GEMM operands to bf16 (f32 accumulation), pads M to the row tile and
    Cout up to a multiple of 128 (lane-dense, unmasked stores).
    """
    M, K = x2d.shape
    Cout = w_mat.shape[1]
    Cp = _round_up(Cout, 128)
    TM = _choose_tm(M)
    Mp = pl.cdiv(M, TM) * TM

    x = jnp.pad(x2d.astype(jnp.bfloat16), ((0, Mp - M), (0, 0)))
    w = jnp.pad(w_mat.astype(jnp.bfloat16), ((0, 0), (0, Cp - Cout)))
    sh = jnp.pad(shift.reshape(1, Cout).astype(jnp.float32),
                 ((0, 0), (0, Cp - Cout)))

    out = pl.pallas_call(
        functools.partial(_gemm_bias_kernel, relu=relu),
        out_shape=jax.ShapeDtypeStruct((Mp, Cp), jnp.float32),
        grid_spec=pltpu.PrefetchScalarGridSpec(
            num_scalar_prefetch=0,
            grid=(Mp // TM,),
            in_specs=[
                pl.BlockSpec((TM, K), lambda i: (i, 0)),
                pl.BlockSpec((K, Cp), lambda i: (0, 0)),
                pl.BlockSpec((1, Cp), lambda i: (0, 0)),
            ],
            out_specs=pl.BlockSpec((TM, Cp), lambda i: (i, 0)),
        ),
        compiler_params=pltpu.CompilerParams(
            dimension_semantics=("parallel",)),
    )(x, w, sh)
    return out[:M, :Cout]


# ------------------------------ conv wrappers ---------------------------------
def _im2col_nhwc(x, kh, kw, stride, padding):
    """x: (N, H, W, C) -> patches (N*Ho*Wo, kh*kw*C), K order = (dy, dx, c)."""
    N, H, W, C = x.shape
    xp = jnp.pad(x, ((0, 0), (padding, padding), (padding, padding), (0, 0)))
    Hp, Wp = H + 2 * padding, W + 2 * padding
    Ho = (Hp - kh) // stride + 1
    Wo = (Wp - kw) // stride + 1
    cols = []
    for dy in range(kh):
        for dx in range(kw):
            sl = xp[:,
                    dy:dy + (Ho - 1) * stride + 1:stride,
                    dx:dx + (Wo - 1) * stride + 1:stride, :]
            cols.append(sl)                               # (N, Ho, Wo, C)
    patches = jnp.stack(cols, axis=3)                     # (N, Ho, Wo, kh*kw, C)
    patches = patches.reshape(N * Ho * Wo, kh * kw * C)
    return patches, Ho, Wo


def conv2d_nhwc(x, w, *, stride=1, padding=0, scale=None, shift=None, relu=False):
    """Conv2d on NHWC activations with PyTorch OIHW weights.

    BN/bias `scale` is folded into the weights; `shift` + optional ReLU are
    fused in the Pallas epilogue.  Returns NHWC.
    """
    N, H, W, Cin = x.shape
    Cout, _, KH, KW = w.shape
    if KH == 1 and KW == 1 and stride == 1 and padding == 0:
        # 1x1 conv: pure GEMM, no im2col.
        patches = x.reshape(N * H * W, Cin)
        Ho, Wo = H, W
        w_mat = w.reshape(Cout, Cin).T                    # (Cin, Cout)
    else:
        patches, Ho, Wo = _im2col_nhwc(x, KH, KW, stride, padding)
        # HWIO flatten matches the (dy, dx, c) patch ordering.
        w_mat = w.transpose(2, 3, 1, 0).reshape(KH * KW * Cin, Cout)

    if scale is not None:
        w_mat = w_mat * scale.reshape(1, Cout).astype(w_mat.dtype)
    if shift is None:
        shift = jnp.zeros((Cout,), jnp.float32)

    out = _pallas_gemm_bias(patches, w_mat, shift, relu)
    return out.reshape(N, Ho, Wo, Cout)


# ---------------------------- parameter setup --------------------------------
def xavier_uniform(key, shape):
    cout, cin, kh, kw = shape
    fan_in = cin * kh * kw
    fan_out = cout * kh * kw
    a = (6.0 / (fan_in + fan_out)) ** 0.5
    return jax.random.uniform(key, shape, jnp.float32, -a, a)


def default_bias(key, cout, fan_in):
    b = 1.0 / (fan_in ** 0.5)
    return jax.random.uniform(key, (cout,), jnp.float32, -b, b)


def fold_bn(gamma, beta, mean, var, eps=1e-5):
    scale = gamma / jnp.sqrt(var + eps)
    shift = beta - mean * scale
    return scale, shift


def make_ssd_params(key, in_channels, out_channels, mid_channels,
                    num_defaults, label_num):
    keys = iter(jax.random.split(key, 256))
    p = {}
    # synthetic backbone: one 3x3 conv (pad=1) + ReLU to out_channels[0]
    p["bb_w"] = xavier_uniform(next(keys), (out_channels[0], in_channels, 3, 3))
    p["bb_b"] = default_bias(next(keys), out_channels[0], in_channels * 9)

    # additional blocks
    blocks = []
    for i, (ic, oc, mc) in enumerate(
            zip(out_channels[:-1], out_channels[1:], mid_channels)):
        w1 = xavier_uniform(next(keys), (mc, ic, 1, 1))
        g1 = jax.random.uniform(next(keys), (mc,), jnp.float32, 0.5, 1.5)
        b1 = jax.random.uniform(next(keys), (mc,), jnp.float32, -0.1, 0.1)
        s1, sh1 = fold_bn(g1, b1, jnp.zeros((mc,)), jnp.ones((mc,)))
        w2 = xavier_uniform(next(keys), (oc, mc, 3, 3))
        g2 = jax.random.uniform(next(keys), (oc,), jnp.float32, 0.5, 1.5)
        b2 = jax.random.uniform(next(keys), (oc,), jnp.float32, -0.1, 0.1)
        s2, sh2 = fold_bn(g2, b2, jnp.zeros((oc,)), jnp.ones((oc,)))
        blocks.append(dict(w1=w1, bn1_scale=s1, bn1_shift=sh1,
                           w2=w2, bn2_scale=s2, bn2_shift=sh2,
                           stride=2 if i < 3 else 1,
                           pad=1 if i < 3 else 0))
    p["blocks"] = blocks

    # loc / conf heads (3x3, pad=1, with bias)
    heads = []
    for nd, oc in zip(num_defaults, out_channels):
        lw = xavier_uniform(next(keys), (nd * 4, oc, 3, 3))
        lb = default_bias(next(keys), nd * 4, oc * 9)
        cw = xavier_uniform(next(keys), (nd * label_num, oc, 3, 3))
        cb = default_bias(next(keys), nd * label_num, oc * 9)
        heads.append(dict(loc_w=lw, loc_b=lb, conf_w=cw, conf_b=cb))
    p["heads"] = heads
    return p


# ------------------------------- forward -------------------------------------
def ssd_forward(params, x_nchw, label_num):
    # NCHW -> NHWC once at the boundary; all compute stays NHWC.
    x = x_nchw.transpose(0, 2, 3, 1)

    # backbone
    f = conv2d_nhwc(x, params["bb_w"], stride=1, padding=1,
                    shift=params["bb_b"], relu=True)
    detection_feed = [f]

    # additional blocks: conv1x1+BN+ReLU, conv3x3(+stride/pad)+BN+ReLU
    for blk in params["blocks"]:
        f = conv2d_nhwc(f, blk["w1"], stride=1, padding=0,
                        scale=blk["bn1_scale"], shift=blk["bn1_shift"],
                        relu=True)
        f = conv2d_nhwc(f, blk["w2"], stride=blk["stride"], padding=blk["pad"],
                        scale=blk["bn2_scale"], shift=blk["bn2_shift"],
                        relu=True)
        detection_feed.append(f)

    # bbox_view: fused loc+conf conv per feature map (single GEMM, shared
    # im2col), then reproduce PyTorch's NCHW .view(N,4,-1)/(N,C,-1) exactly.
    locs, confs = [], []
    for s, head in zip(detection_feed, params["heads"]):
        n = s.shape[0]
        nd4 = head["loc_w"].shape[0]
        w_fused = jnp.concatenate([head["loc_w"], head["conf_w"]], axis=0)
        b_fused = jnp.concatenate([head["loc_b"], head["conf_b"]], axis=0)
        o = conv2d_nhwc(s, w_fused, stride=1, padding=1, shift=b_fused)
        l = o[..., :nd4].transpose(0, 3, 1, 2).reshape(n, 4, -1)
        c = o[..., nd4:].transpose(0, 3, 1, 2).reshape(n, label_num, -1)
        locs.append(l)
        confs.append(c)
    locs = jnp.concatenate(locs, axis=2)
    confs = jnp.concatenate(confs, axis=2)
    return locs.transpose(0, 2, 1), confs.transpose(0, 2, 1)


# --------------------------------- main ---------------------------------------
if __name__ == "__main__":
    key = jax.random.PRNGKey(0)
    k_param, k_x = jax.random.split(key)

    # small-scale SSD config (NVIDIA structure, scaled-down channels)
    in_channels = 4
    out_channels = [32, 16, 16, 8, 8, 8]       # backbone.out_channels
    mid_channels = [8, 8, 8, 8, 8]             # additional-block bottlenecks
    num_defaults = [4, 6, 6, 6, 4, 4]
    label_num = 8

    # input 33x33 so feature maps follow SSD pattern 33->17->9->5->3->1
    x = jax.random.normal(k_x, (2, in_channels, 33, 33), jnp.float32)

    params = make_ssd_params(k_param, in_channels, out_channels,
                             mid_channels, num_defaults, label_num)

    locs, confs = ssd_forward(params, x, label_num)
    jax.block_until_ready((locs, confs))

    fmap_sizes = [33, 17, 9, 5, 3, 1]
    total = sum(nd * s * s for nd, s in zip(num_defaults, fmap_sizes))
    assert locs.shape == (2, total, 4), locs.shape
    assert confs.shape == (2, total, label_num), confs.shape
    print("KERNEL_OK")
</pallas_src>

<mosaic_0001>
module attributes {stable_mosaic.version = 11 : i64} {
  func.func @_gemm_bias_kernel(%arg0: i32, %arg1: memref<736x36xbf16, #tpu.memory_space<vmem>>, %arg2: memref<36x128xbf16, #tpu.memory_space<vmem>>, %arg3: memref<1x128xf32, #tpu.memory_space<vmem>>, %arg4: memref<736x128xf32, #tpu.memory_space<vmem>>) attributes {dimension_semantics = [#tpu.dimension_semantics<parallel>], iteration_bounds = array<i64: 3>, scalar_prefetch = 0 : i64, scratch_operands = 0 : i64, tpu.core_type = #tpu.core_type<tc>, window_params = [{transform_indices = @transform_0, window_bounds = array<i64: 736, 36>}, {pipeline_mode = #tpu.pipeline_mode<synchronous>, transform_indices = @transform_1, window_bounds = array<i64: 36, 128>}, {pipeline_mode = #tpu.pipeline_mode<synchronous>, transform_indices = @transform_2, window_bounds = array<i64: 1, 128>}, {transform_indices = @transform_3, window_bounds = array<i64: 736, 128>}]} {
    %c0 = arith.constant 0 : index
    %c0_0 = arith.constant 0 : index
    %0 = vector.load %arg1[%c0, %c0_0] : memref<736x36xbf16, #tpu.memory_space<vmem>>, vector<736x36xbf16>
    %c0_1 = arith.constant 0 : index
    %c0_2 = arith.constant 0 : index
    %1 = vector.load %arg2[%c0_1, %c0_2] : memref<36x128xbf16, #tpu.memory_space<vmem>>, vector<36x128xbf16>
    %cst = arith.constant dense<0.000000e+00> : vector<736x128xf32>
    %2 = tpu.matmul %0, %1, %cst {dimension_numbers = #tpu.dot_dimension_numbers<[1], [0], [0], [1], [0, 0, 1, 1], [], []>} : vector<736x36xbf16>, vector<36x128xbf16>, vector<736x128xf32> -> vector<736x128xf32>
    %c0_3 = arith.constant 0 : index
    %c0_4 = arith.constant 0 : index
    %3 = vector.load %arg3[%c0_3, %c0_4] : memref<1x128xf32, #tpu.memory_space<vmem>>, vector<1x128xf32>
    %4 = vector.broadcast %3 : vector<1x128xf32> to vector<736x128xf32>
    %5 = arith.addf %2, %4 : vector<736x128xf32>
    %cst_5 = arith.constant 0.000000e+00 : f32
    %6 = vector.broadcast %cst_5 : f32 to vector<736x128xf32>
    %7 = arith.maximumf %5, %6 : vector<736x128xf32>
    %c0_6 = arith.constant 0 : index
    %c0_7 = arith.constant 0 : index
    %8 = vector.load %arg4[%c0_6, %c0_7] : memref<736x128xf32, #tpu.memory_space<vmem>>, vector<736x128xf32>
    tpu.vector_store %arg4[%c0_6, %c0_7], %7 {strides = array<i32>} : memref<736x128xf32, #tpu.memory_space<vmem>>, vector<736x128xf32>,
    return
  }
  func.func @transform_0(%arg0: i32) -> (i32, i32) {
    %c0_i32 = arith.constant 0 : i32
    %c0_i32_0 = arith.constant 0 : i32
    return %arg0, %c0_i32 : i32, i32
  }
  func.func @transform_1(%arg0: i32) -> (i32, i32) {
    %c0_i32 = arith.constant 0 : i32
    %c0_i32_0 = arith.constant 0 : i32
    %c0_i32_1 = arith.constant 0 : i32
    return %c0_i32, %c0_i32_0 : i32, i32
  }
  func.func @transform_2(%arg0: i32) -> (i32, i32) {
    %c0_i32 = arith.constant 0 : i32
    %c0_i32_0 = arith.constant 0 : i32
    %c0_i32_1 = arith.constant 0 : i32
    return %c0_i32, %c0_i32_0 : i32, i32
  }
  func.func @transform_3(%arg0: i32) -> (i32, i32) {
    %c0_i32 = arith.constant 0 : i32
    %c0_i32_0 = arith.constant 0 : i32
    return %arg0, %c0_i32 : i32, i32
  }
}

</mosaic_0001>

<llo_original>
// kernel: tpu_custom_call.1
$region0: #{tpu_custom_call.1}
  #allocation0 [shape = 'u32[]', space=smem, size = 0x4, offset = 0x4, fixed_abs, tag = 'smem constant byte address 0x4 - core index']
  #allocation1 [shape = 'u32[144,128]{1,0:T(1,128)}', space=vmem, size = 0x12000, scoped, tag = 'internal scratch']
  %s0 = inlined_call_operand.vmem [shape: bf16[2208,36], index: 0, kind: input, shape index: {}]
  %s1 = inlined_call_operand.hbm [shape: bf16[36,128], index: 1, kind: input, shape index: {}]
  %s2 = inlined_call_operand.hbm [shape: f32[1,128], index: 2, kind: input, shape index: {}]
  %s3 = inlined_call_operand.hbm [shape: f32[2208,128], index: 3, kind: output, shape index: {}]
  %s4 = sld [smem:[#allocation0]]
  $region53: #{tpu_custom_call.1} parent=0
    _
  %s6 = ssub.s32 1, %s4
  %s7 = scalar_select 0, %s6, %s4
  $region1: #{tpu_custom_call.1} parent=0
    #allocation2 [shape = 'u8[10240]{0}', space=vmem, size = 0x2800, scoped, tag = 'input window, operand 1, single buffered']
    #allocation3 [shape = 's32[2]{0}', space=sflag, size = 0x8, scoped, tag = 'scoped memory for tpu_custom_call.1']
    #allocation4 [shape = 's32[2]{0}', space=sflag, size = 0x8, scoped, tag = 'scoped memory for tpu_custom_call.1']
    #allocation5 [shape = 'u8[512]{0}', space=vmem, size = 0x400, scoped, tag = 'input window, operand 2, single buffered']
    #allocation6 [shape = 's32[1]{0}', space=sflag, size = 0x4, scoped, tag = 'scoped memory for tpu_custom_call.1']
    #allocation7 [shape = 'u8[753664]{0}', space=vmem, size = 0xb8000, scoped, tag = 'output window, operand 0']
    %8 = vsyncpa [#allocation3], 0
    %9 = vsyncpa [#allocation6], 0
    %10 = vsyncpa [#allocation4], 0
    %s11 = scalar_lea.sflag [#allocation4], 1
    %12 = vsyncpa %s11, 0
    loop: start=0, step=1, limit=5
    $region2: #{tpu_custom_call.1} parent=1 // loop_pre_header
      _
    $region3: #{tpu_custom_call.1} parent=1 // loop_header
      %s14 = sphi 0, %s18
      %p15 = scmp.ge.s32.totalorder %s14, 5
      %s24 = sphi 0, %s26
      %s27 = sphi 0, %s24
      %s28 = sphi 0, %s27
      %s44 = sphi 0, %s28
      %s48 = sphi 0, %s48
      %s50 = sphi 0, %s48
      %s51 = sphi 0, %s50
      %s65 = sphi 0, %s51
      %s69 = sphi 0, %s69
      %s71 = sphi 0, %s69
      %s72 = sphi 0, %s71
      %s86 = sphi 0, %s72
      %s92 = sphi 0, %s94
      %s95 = sphi 0, %s92
      %s96 = sphi 0, %s95
      %s112 = sphi 0, %s96
    $region4: #{tpu_custom_call.1} parent=1 // loop_header_branch
      %17 = sbr.rel (%p15) target = $region8
    $region5: #{tpu_custom_call.1} parent=1 // loop_body
      %s19 = ssub.s32 %s14, 1
      %s20 = ssub.s32 %s14, 2
      %s21 = sadd.s32 %s14, 1
      %s22 = ssub.s32 %s14, %s21
      %p23 = scmp.eq.s32.totalorder %s22, 0
      %s25 = sadd.s32 %s24, 1
      %s26 = scalar_select %p23, %s24, %s25
      %p29 = pneg %p23
      %p30 = scmp.eq.s32.totalorder %s14, 2
      %p31 = por %p29, %p30
      %p32 = scmp.ne.s32.totalorder %s24, %s27
      %p33 = scmp.eq.s32.totalorder %s14, 0
      %p34 = por %p32, %p33
      %p35 = scmp.ne.s32.totalorder %s24, %s27
      %p36 = scmp.eq.s32.totalorder %s19, 2
      %p37 = por %p35, %p36
      %p38 = scmp.ne.s32.totalorder %s27, %s28
      %p39 = scmp.eq.s32.totalorder %s19, 0
      %p40 = por %p38, %p39
      %p41 = scmp.ne.s32.totalorder %s27, %s28
      %p42 = scmp.eq.s32.totalorder %s20, 2
      %p43 = por %p41, %p42
      %p45 = scmp.ne.s32.totalorder %s28, %s44
      %p46 = scmp.eq.s32.totalorder %s20, 0
      %p47 = por %p45, %p46
      %s49 = sadd.s32 %s48, 1
      %p52 = scmp.eq.s32.totalorder %s14, 2
      %p53 = scmp.ne.s32.totalorder %s48, %s50
      %p54 = scmp.eq.s32.totalorder %s14, 0
      %p55 = por %p53, %p54
      %p56 = scmp.ne.s32.totalorder %s48, %s50
      %p57 = scmp.eq.s32.totalorder %s19, 2
      %p58 = por %p56, %p57
      %p59 = scmp.ne.s32.totalorder %s50, %s51
      %p60 = scmp.eq.s32.totalorder %s19, 0
      %p61 = por %p59, %p60
      %p62 = scmp.ne.s32.totalorder %s50, %s51
      %p63 = scmp.eq.s32.totalorder %s20, 2
      %p64 = por %p62, %p63
      %p66 = scmp.ne.s32.totalorder %s51, %s65
      %p67 = scmp.eq.s32.totalorder %s20, 0
      %p68 = por %p66, %p67
      %s70 = sadd.s32 %s69, 1
      %p73 = scmp.eq.s32.totalorder %s14, 2
      %p74 = scmp.ne.s32.totalorder %s69, %s71
      %p75 = scmp.eq.s32.totalorder %s14, 0
      %p76 = por %p74, %p75
      %p77 = scmp.ne.s32.totalorder %s69, %s71
      %p78 = scmp.eq.s32.totalorder %s19, 2
      %p79 = por %p77, %p78
      %p80 = scmp.ne.s32.totalorder %s71, %s72
      %p81 = scmp.eq.s32.totalorder %s19, 0
      %p82 = por %p80, %p81
      %p83 = scmp.ne.s32.totalorder %s71, %s72
      %p84 = scmp.eq.s32.totalorder %s20, 2
      %p85 = por %p83, %p84
      %p87 = scmp.ne.s32.totalorder %s72, %s86
      %p88 = scmp.eq.s32.totalorder %s20, 0
      %p89 = por %p87, %p88
      %s90 = ssub.s32 %s14, %s21
      %p91 = scmp.eq.s32.totalorder %s90, 0
      %s93 = sadd.s32 %s92, 1
      %s94 = scalar_select %p91, %s92, %s93
      %p97 = pneg %p91
      %p98 = scmp.eq.s32.totalorder %s14, 2
      %p99 = por %p97, %p98
      %p100 = scmp.ne.s32.totalorder %s92, %s95
      %p101 = scmp.eq.s32.totalorder %s14, 0
      %p102 = por %p100, %p101
      %p103 = scmp.ne.s32.totalorder %s92, %s95
      %p104 = scmp.eq.s32.totalorder %s19, 2
      %p105 = por %p103, %p104
      %p106 = scmp.ne.s32.totalorder %s95, %s96
      %p107 = scmp.eq.s32.totalorder %s19, 0
      %p108 = por %p106, %p107
      %p109 = scmp.ne.s32.totalorder %s95, %s96
      %p110 = scmp.eq.s32.totalorder %s20, 2
      %p111 = por %p109, %p110
      %p113 = scmp.ne.s32.totalorder %s96, %s112
      %p114 = scmp.eq.s32.totalorder %s20, 0
      %p115 = por %p113, %p114
      %p116 = scmp.le.s32.totalorder 1, %s14
      %p117 = scmp.lt.s32.totalorder %s14, 4
      %p118 = pnand %p116, %p117
      %p119 = pneg %p118
      // Predicated region
      $region9: #{tpu_custom_call.1} parent=5 // pred_check
        _
      $region10: #{tpu_custom_call.1} parent=5 // pred_check_branch
        %121 = sbr.rel (%p118) target = $region12
      $region11: #{tpu_custom_call.1} parent=5 // pred_region
        %s122 = ssub.s32 %s14, 1
        // Predicated region
        $region13: #{tpu_custom_call.1} parent=11 // pred_check
          %p123 = pneg %p61
        $region14: #{tpu_custom_call.1} parent=11 // pred_check_branch
          %125 = sbr.rel (%p123) target = $region16
        $region15: #{tpu_custom_call.1} parent=11 // pred_region
          %s127 = ssub.s32 320, 320
          %128 = vsyncadd [#allocation3], %s127
          %s129 = sshll.u32 [#allocation2], 4
          %s130 = int_to_ptr.vmem [resolvable:$true] %s129
          %135 = dma.hbm_to_vmem [thread:$0]  %s1, 320, %s130, [#allocation3], 64, 64, 4
        $region16: #{tpu_custom_call.1} parent=11 // pred_fallthru
          _
        // Predicated region
        $region17: #{tpu_custom_call.1} parent=11 // pred_check
          %p136 = pneg %p82
        $region18: #{tpu_custom_call.1} parent=11 // pred_check_branch
          %138 = sbr.rel (%p136) target = $region20
        $region19: #{tpu_custom_call.1} parent=11 // pred_region
          %s140 = ssub.s32 16, 16
          %141 = vsyncadd [#allocation6], %s140
          %s143 = sshll.u32 [#allocation5], 4
          %s144 = int_to_ptr.vmem [resolvable:$true] %s143
          %146 = dma.hbm_to_vmem [thread:$0]  %s2, 16, %s144, [#allocation6]
        $region20: #{tpu_custom_call.1} parent=11 // pred_fallthru
          _
      $region12: #{tpu_custom_call.1} parent=5 // pred_fallthru
        _
      %p147 = scmp.lt.s32.totalorder %s14, 3
      // Predicated region
      $region21: #{tpu_custom_call.1} parent=5 // pred_check
        %p148 = pneg %p147
      $region22: #{tpu_custom_call.1} parent=5 // pred_check_branch
        %150 = sbr.rel (%p148) target = $region24
      $region23: #{tpu_custom_call.1} parent=5 // pred_region
        // Predicated region
        $region25: #{tpu_custom_call.1} parent=23 // pred_check
          %p151 = pneg %p34
        $region26: #{tpu_custom_call.1} parent=23 // pred_check_branch
          %153 = sbr.rel (%p151) target = $region28
        $region27: #{tpu_custom_call.1} parent=23 // pred_region
          %s154 = smul.u32 92, %s14
          %p155 = scmp.lt.s32.totalorder %s154, 275
          %s156 = scalar_select %p155, %s154, 275
          %s157 = smul.addr %s156, 4
          %s158 = scalar_lea.vmem %s0, %s157
          %s159 = smul.u32 92, %s14
        $region28: #{tpu_custom_call.1} parent=23 // pred_fallthru
          _
      $region24: #{tpu_custom_call.1} parent=5 // pred_fallthru
        _
      %p160 = scmp.le.s32.totalorder 1, %s14
      %p161 = scmp.lt.s32.totalorder %s14, 4
      %p162 = pnand %p160, %p161
      %p163 = pneg %p162
      // Predicated region
      $region29: #{tpu_custom_call.1} parent=5 // pred_check
        _
      $region30: #{tpu_custom_call.1} parent=5 // pred_check_branch
        %165 = sbr.rel (%p162) target = $region32
      $region31: #{tpu_custom_call.1} parent=5 // pred_region
        %s166 = ssub.s32 %s14, 1
        // Predicated region
        $region33: #{tpu_custom_call.1} parent=31 // pred_check
          %p167 = pneg %p61
        $region34: #{tpu_custom_call.1} parent=31 // pred_check_branch
          %169 = sbr.rel (%p167) target = $region36
        $region35: #{tpu_custom_call.1} parent=31 // pred_region
          %170 = dma.done [#allocation3], 320
        $region36: #{tpu_custom_call.1} parent=31 // pred_fallthru
          _
        // Predicated region
        $region37: #{tpu_custom_call.1} parent=31 // pred_check
          %p171 = pneg %p82
        $region38: #{tpu_custom_call.1} parent=31 // pred_check_branch
          %173 = sbr.rel (%p171) target = $region40
        $region39: #{tpu_custom_call.1} parent=31 // pred_region
          %174 = dma.done [#allocation6], 16
        $region40: #{tpu_custom_call.1} parent=31 // pred_fallthru
          _
        %s175 = smul.u32 92, %s19
        %p176 = scmp.lt.s32.totalorder %s175, 275
        %s177 = scalar_select %p176, %s175, 275
        %s178 = smul.addr %s177, 4
        %s179 = scalar_lea.vmem %s0, %s178
        %p180 = pneg %p40
        %p181 = pneg %p37
        %p182 = pneg %p61
        %p183 = pneg %p58
        %p184 = pneg %p82
        %p185 = pneg %p79
        %p186 = pneg %p108
        %p187 = pneg %p105
        %s188 = sand.u32 %s95, 1
        %s189 = scalar_lea.sflag [#allocation4], %s188
        %s190 = sand.u32 %s95, 1
        %s191 = smul.addr %s190, 736
        %s192 = scalar_lea.vmem [#allocation7], %s191
        %s193 = smul.u32 92, %s19
        %p194 = scmp.lt.s32.totalorder %s193, 275
        %s195 = scalar_select %p194, %s193, 275
        %s196 = smul.addr %s195, 4
        %s197 = scalar_lea.vmem %s0, %s196
        %s198 = smul.u32 92, %s19
        %s199 = smul.u32 92, %s19
        %v201 = vld [vmem:[%s197] sm:$0xf]
        %v202 = vld [vmem:[%s197 + $0x4] sm:$0xf]
        %v203 = vld [vmem:[%s197 + $0x8] sm:$0xf]
        %v204 = vld [vmem:[%s197 + $0xc] sm:$0xf]
        %v205 = vld [vmem:[%s197 + $0x10] sm:$0xf]
        %v206 = vld [vmem:[%s197 + $0x14] sm:$0xf]
        %v207 = vld [vmem:[%s197 + $0x18] sm:$0xf]
        %v208 = vld [vmem:[%s197 + $0x1c] sm:$0xf]
        %v209 = vld [vmem:[%s197 + $0x20] sm:$0xf]
        %v210 = vld [vmem:[%s197 + $0x24] sm:$0xf]
        %v211 = vld [vmem:[%s197 + $0x28] sm:$0xf]
        %v212 = vld [vmem:[%s197 + $0x2c] sm:$0xf]
        %v213 = vld [vmem:[%s197 + $0x30] sm:$0xf]
        %v214 = vld [vmem:[%s197 + $0x34] sm:$0xf]
        %v215 = vld [vmem:[%s197 + $0x38] sm:$0xf]
        %v216 = vld [vmem:[%s197 + $0x3c] sm:$0xf]
        %v217 = vld [vmem:[%s197 + $0x40] sm:$0xf]
        %v218 = vld [vmem:[%s197 + $0x44] sm:$0xf]
        %v219 = vld [vmem:[%s197 + $0x48] sm:$0xf]
        %v220 = vld [vmem:[%s197 + $0x4c] sm:$0xf]
        %v221 = vld [vmem:[%s197 + $0x50] sm:$0xf]
        %v222 = vld [vmem:[%s197 + $0x54] sm:$0xf]
        %v223 = vld [vmem:[%s197 + $0x58] sm:$0xf]
        %v224 = vld [vmem:[%s197 + $0x5c] sm:$0xf]
        %v225 = vld [vmem:[%s197 + $0x60] sm:$0xf]
        %v226 = vld [vmem:[%s197 + $0x64] sm:$0xf]
        %v227 = vld [vmem:[%s197 + $0x68] sm:$0xf]
        %v228 = vld [vmem:[%s197 + $0x6c] sm:$0xf]
        %v229 = vld [vmem:[%s197 + $0x70] sm:$0xf]
        %v230 = vld [vmem:[%s197 + $0x74] sm:$0xf]
        %v231 = vld [vmem:[%s197 + $0x78] sm:$0xf]
        %v232 = vld [vmem:[%s197 + $0x7c] sm:$0xf]
        %v233 = vld [vmem:[%s197 + $0x80] sm:$0xf]
        %v234 = vld [vmem:[%s197 + $0x84] sm:$0xf]
        %v235 = vld [vmem:[%s197 + $0x88] sm:$0xf]
        %v236 = vld [vmem:[%s197 + $0x8c] sm:$0xf]
        %v237 = vld [vmem:[%s197 + $0x90] sm:$0xf]
        %v238 = vld [vmem:[%s197 + $0x94] sm:$0xf]
        %v239 = vld [vmem:[%s197 + $0x98] sm:$0xf]
        %v240 = vld [vmem:[%s197 + $0x9c] sm:$0xf]
        %v241 = vld [vmem:[%s197 + $0xa0] sm:$0xf]
        %v242 = vld [vmem:[%s197 + $0xa4] sm:$0xf]
        %v243 = vld [vmem:[%s197 + $0xa8] sm:$0xf]
        %v244 = vld [vmem:[%s197 + $0xac] sm:$0xf]
        %v245 = vld [vmem:[%s197 + $0xb0] sm:$0xf]
        %v246 = vld [vmem:[%s197 + $0xb4] sm:$0xf]
        %v247 = vld [vmem:[%s197 + $0xb8] sm:$0xf]
        %v248 = vld [vmem:[%s197 + $0xbc] sm:$0xf]
        %v249 = vld [vmem:[%s197 + $0xc0] sm:$0xf]
        %v250 = vld [vmem:[%s197 + $0xc4] sm:$0xf]
        %v251 = vld [vmem:[%s197 + $0xc8] sm:$0xf]
        %v252 = vld [vmem:[%s197 + $0xcc] sm:$0xf]
        %v253 = vld [vmem:[%s197 + $0xd0] sm:$0xf]
        %v254 = vld [vmem:[%s197 + $0xd4] sm:$0xf]
        %v255 = vld [vmem:[%s197 + $0xd8] sm:$0xf]
        %v256 = vld [vmem:[%s197 + $0xdc] sm:$0xf]
        %v257 = vld [vmem:[%s197 + $0xe0] sm:$0xf]
        %v258 = vld [vmem:[%s197 + $0xe4] sm:$0xf]
        %v259 = vld [vmem:[%s197 + $0xe8] sm:$0xf]
        %v260 = vld [vmem:[%s197 + $0xec] sm:$0xf]
        %v261 = vld [vmem:[%s197 + $0xf0] sm:$0xf]
        %v262 = vld [vmem:[%s197 + $0xf4] sm:$0xf]
        %v263 = vld [vmem:[%s197 + $0xf8] sm:$0xf]
        %v264 = vld [vmem:[%s197 + $0xfc] sm:$0xf]
        %v265 = vld [vmem:[%s197 + $0x100] sm:$0xf]
        %v266 = vld [vmem:[%s197 + $0x104] sm:$0xf]
        %v267 = vld [vmem:[%s197 + $0x108] sm:$0xf]
        %v268 = vld [vmem:[%s197 + $0x10c] sm:$0xf]
        %v269 = vld [vmem:[%s197 + $0x110] sm:$0xf]
        %v270 = vld [vmem:[%s197 + $0x114] sm:$0xf]
        %v271 = vld [vmem:[%s197 + $0x118] sm:$0xf]
        %v272 = vld [vmem:[%s197 + $0x11c] sm:$0xf]
        %v273 = vld [vmem:[%s197 + $0x120] sm:$0xf]
        %v274 = vld [vmem:[%s197 + $0x124] sm:$0xf]
        %v275 = vld [vmem:[%s197 + $0x128] sm:$0xf]
        %v276 = vld [vmem:[%s197 + $0x12c] sm:$0xf]
        %v277 = vld [vmem:[%s197 + $0x130] sm:$0xf]
        %v278 = vld [vmem:[%s197 + $0x134] sm:$0xf]
        %v279 = vld [vmem:[%s197 + $0x138] sm:$0xf]
        %v280 = vld [vmem:[%s197 + $0x13c] sm:$0xf]
        %v281 = vld [vmem:[%s197 + $0x140] sm:$0xf]
        %v282 = vld [vmem:[%s197 + $0x144] sm:$0xf]
        %v283 = vld [vmem:[%s197 + $0x148] sm:$0xf]
        %v284 = vld [vmem:[%s197 + $0x14c] sm:$0xf]
        %v285 = vld [vmem:[%s197 + $0x150] sm:$0xf]
        %v286 = vld [vmem:[%s197 + $0x154] sm:$0xf]
        %v287 = vld [vmem:[%s197 + $0x158] sm:$0xf]
        %v288 = vld [vmem:[%s197 + $0x15c] sm:$0xf]
        %v289 = vld [vmem:[%s197 + $0x160] sm:$0xf]
        %v290 = vld [vmem:[%s197 + $0x164] sm:$0xf]
        %v291 = vld [vmem:[%s197 + $0x168] sm:$0xf]
        %v292 = vld [vmem:[%s197 + $0x16c] sm:$0xf]
        %v293 = vld [vmem:[#allocation2] sm:$0xf]
        %v294 = vld [vmem:[#allocation2 + $0x4] sm:$0xf]
        %v295 = vld [vmem:[#allocation2 + $0x8] sm:$0xf]
        %v296 = vld [vmem:[#allocation2 + $0xc] sm:$0xf]
        %v297 = vld [vmem:[#allocation2 + $0x10] sm:$0x3]
        %v298 = vld [vmem:[#allocation5] sm:$0x1]
        %v300 = vlaneseq
        %v301 = vshrl.u32 %v300, 7
        %v302 = vsub.s32 0, %v301
        %v303 = vrot.slane %v298, %v302
        %v397 = vunpack.c.l.b16 %v201
        %v398 = vunpack.c.l.b16 %v202
        %v399 = vunpack.c.l.b16 %v203
        %v400 = vunpack.c.l.b16 %v204
        %v401 = vunpack.c.l.b16 %v205
        %v402 = vunpack.c.l.b16 %v206
        %v403 = vunpack.c.l.b16 %v207
        %v404 = vunpack.c.l.b16 %v208
        %v405 = vunpack.c.l.b16 %v209
        %v406 = vunpack.c.l.b16 %v210
        %v407 = vunpack.c.l.b16 %v211
        %v408 = vunpack.c.l.b16 %v212
        %v409 = vunpack.c.l.b16 %v213
        %v410 = vunpack.c.l.b16 %v214
        %v411 = vunpack.c.l.b16 %v215
        %v412 = vunpack.c.l.b16 %v216
        %v413 = vunpack.c.l.b16 %v217
        %v414 = vunpack.c.l.b16 %v218
        %v415 = vunpack.c.l.b16 %v219
        %v416 = vunpack.c.l.b16 %v220
        %v417 = vunpack.c.l.b16 %v221
        %v418 = vunpack.c.l.b16 %v222
        %v419 = vunpack.c.l.b16 %v223
        %v420 = vunpack.c.l.b16 %v224
        %v421 = vunpack.c.l.b16 %v225
        %v422 = vunpack.c.l.b16 %v226
        %v423 = vunpack.c.l.b16 %v227
        %v424 = vunpack.c.l.b16 %v228
        %v425 = vunpack.c.l.b16 %v229
        %v426 = vunpack.c.l.b16 %v230
        %v427 = vunpack.c.l.b16 %v231
        %v428 = vunpack.c.l.b16 %v232
        %v429 = vunpack.c.l.b16 %v233
        %v430 = vunpack.c.l.b16 %v234
        %v431 = vunpack.c.l.b16 %v235
        %v432 = vunpack.c.l.b16 %v236
        %v433 = vunpack.c.l.b16 %v237
        %v434 = vunpack.c.l.b16 %v238
        %v435 = vunpack.c.l.b16 %v239
        %v436 = vunpack.c.l.b16 %v240
        %v437 = vunpack.c.l.b16 %v241
        %v438 = vunpack.c.l.b16 %v242
        %v439 = vunpack.c.l.b16 %v243
        %v440 = vunpack.c.l.b16 %v244
        %v441 = vunpack.c.l.b16 %v245
        %v442 = vunpack.c.l.b16 %v246
        %v443 = vunpack.c.l.b16 %v247
        %v444 = vunpack.c.l.b16 %v248
        %v445 = vunpack.c.l.b16 %v249
        %v446 = vunpack.c.l.b16 %v250
        %v447 = vunpack.c.l.b16 %v251
        %v448 = vunpack.c.l.b16 %v252
        %v449 = vunpack.c.l.b16 %v253
        %v450 = vunpack.c.l.b16 %v254
        %v451 = vunpack.c.l.b16 %v255
        %v452 = vunpack.c.l.b16 %v256
        %v453 = vunpack.c.l.b16 %v257
        %v454 = vunpack.c.l.b16 %v258
        %v455 = vunpack.c.l.b16 %v259
        %v456 = vunpack.c.l.b16 %v260
        %v457 = vunpack.c.l.b16 %v261
        %v458 = vunpack.c.l.b16 %v262
        %v459 = vunpack.c.l.b16 %v263
        %v460 = vunpack.c.l.b16 %v264
        %v461 = vunpack.c.l.b16 %v265
        %v462 = vunpack.c.l.b16 %v266
        %v463 = vunpack.c.l.b16 %v267
        %v464 = vunpack.c.l.b16 %v268
        %v465 = vunpack.c.l.b16 %v269
        %v466 = vunpack.c.l.b16 %v270
        %v467 = vunpack.c.l.b16 %v271
        %v468 = vunpack.c.l.b16 %v272
        %v469 = vunpack.c.l.b16 %v273
        %v470 = vunpack.c.l.b16 %v274
        %v471 = vunpack.c.l.b16 %v275
        %v472 = vunpack.c.l.b16 %v276
        %v473 = vunpack.c.l.b16 %v277
        %v474 = vunpack.c.l.b16 %v278
        %v475 = vunpack.c.l.b16 %v279
        %v476 = vunpack.c.l.b16 %v280
        %v477 = vunpack.c.l.b16 %v281
        %v478 = vunpack.c.l.b16 %v282
        %v479 = vunpack.c.l.b16 %v283
        %v480 = vunpack.c.l.b16 %v284
        %v481 = vunpack.c.l.b16 %v285
        %v482 = vunpack.c.l.b16 %v286
        %v483 = vunpack.c.l.b16 %v287
        %v484 = vunpack.c.l.b16 %v288
        %v485 = vunpack.c.l.b16 %v289
        %v486 = vunpack.c.l.b16 %v290
        %v487 = vunpack.c.l.b16 %v291
        %v488 = vunpack.c.l.b16 %v292
        %v489 = vpack.c.b16 %v398, %v397
        %v490 = vpack.c.b16 %v400, %v399
        %v491 = vpack.c.b16 %v402, %v401
        %v492 = vpack.c.b16 %v404, %v403
        %v493 = vpack.c.b16 %v406, %v405
        %v494 = vpack.c.b16 %v408, %v407
        %v495 = vpack.c.b16 %v410, %v409
        %v496 = vpack.c.b16 %v412, %v411
        %v497 = vpack.c.b16 %v414, %v413
        %v498 = vpack.c.b16 %v416, %v415
        %v499 = vpack.c.b16 %v418, %v417
        %v500 = vpack.c.b16 %v420, %v419
        %v501 = vpack.c.b16 %v422, %v421
        %v502 = vpack.c.b16 %v424, %v423
        %v503 = vpack.c.b16 %v426, %v425
        %v504 = vpack.c.b16 %v428, %v427
        %v505 = vpack.c.b16 %v430, %v429
        %v506 = vpack.c.b16 %v432, %v431
        %v507 = vpack.c.b16 %v434, %v433
        %v508 = vpack.c.b16 %v436, %v435
        %v509 = vpack.c.b16 %v438, %v437
        %v510 = vpack.c.b16 %v440, %v439
        %v511 = vpack.c.b16 %v442, %v441
        %v512 = vpack.c.b16 %v444, %v443
        %v513 = vpack.c.b16 %v446, %v445
        %v514 = vpack.c.b16 %v448, %v447
        %v515 = vpack.c.b16 %v450, %v449
        %v516 = vpack.c.b16 %v452, %v451
        %v517 = vpack.c.b16 %v454, %v453
        %v518 = vpack.c.b16 %v456, %v455
        %v519 = vpack.c.b16 %v458, %v457
        %v520 = vpack.c.b16 %v460, %v459
        %v521 = vpack.c.b16 %v462, %v461
        %v522 = vpack.c.b16 %v464, %v463
        %v523 = vpack.c.b16 %v466, %v465
        %v524 = vpack.c.b16 %v468, %v467
        %v525 = vpack.c.b16 %v470, %v469
        %v526 = vpack.c.b16 %v472, %v471
        %v527 = vpack.c.b16 %v474, %v473
        %v528 = vpack.c.b16 %v476, %v475
        %v529 = vpack.c.b16 %v478, %v477
        %v530 = vpack.c.b16 %v480, %v479
        %v531 = vpack.c.b16 %v482, %v481
        %v532 = vpack.c.b16 %v484, %v483
        %v533 = vpack.c.b16 %v486, %v485
        %v534 = vpack.c.b16 %v488, %v487
        %v540 = vunpack.c.l.b16 %v293
        %v541 = vunpack.c.l.b16 %v294
        %v542 = vunpack.c.l.b16 %v295
        %v543 = vunpack.c.l.b16 %v296
        %v544 = vunpack.c.l.b16 %v297
        %v545 = vpack.c.b16 %v541, %v540
        %v546 = vpack.c.b16 %v543, %v542
        %v547 = vpack.c.b16 %v544, %v544
        %vm550 = vcmask 293888
        %v552 = vsel %vm550, %v489, 0
        %v555 = vsel %vm550, %v490, 0
        %v558 = vsel %vm550, %v491, 0
        %v561 = vsel %vm550, %v492, 0
        %v564 = vsel %vm550, %v493, 0
        %v567 = vsel %vm550, %v494, 0
        %v570 = vsel %vm550, %v495, 0
        %v573 = vsel %vm550, %v496, 0
        %v576 = vsel %vm550, %v497, 0
        %v579 = vsel %vm550, %v498, 0
        %v582 = vsel %vm550, %v499, 0
        %v585 = vsel %vm550, %v500, 0
        %v588 = vsel %vm550, %v501, 0
        %v591 = vsel %vm550, %v502, 0
        %v594 = vsel %vm550, %v503, 0
        %v597 = vsel %vm550, %v504, 0
        %v600 = vsel %vm550, %v505, 0
        %v603 = vsel %vm550, %v506, 0
        %v606 = vsel %vm550, %v507, 0
        %v609 = vsel %vm550, %v508, 0
        %v612 = vsel %vm550, %v509, 0
        %v615 = vsel %vm550, %v510, 0
        %v618 = vsel %vm550, %v511, 0
        %v621 = vsel %vm550, %v512, 0
        %v624 = vsel %vm550, %v513, 0
        %v627 = vsel %vm550, %v514, 0
        %v630 = vsel %vm550, %v515, 0
        %v633 = vsel %vm550, %v516, 0
        %v636 = vsel %vm550, %v517, 0
        %v639 = vsel %vm550, %v518, 0
        %v642 = vsel %vm550, %v519, 0
        %v645 = vsel %vm550, %v520, 0
        %v648 = vsel %vm550, %v521, 0
        %v651 = vsel %vm550, %v522, 0
        %v654 = vsel %vm550, %v523, 0
        %v657 = vsel %vm550, %v524, 0
        %v660 = vsel %vm550, %v525, 0
        %v663 = vsel %vm550, %v526, 0
        %v666 = vsel %vm550, %v527, 0
        %v669 = vsel %vm550, %v528, 0
        %v672 = vsel %vm550, %v529, 0
        %v675 = vsel %vm550, %v530, 0
        %v678 = vsel %vm550, %v531, 0
        %v681 = vsel %vm550, %v532, 0
        %v684 = vsel %vm550, %v533, 0
        %v687 = vsel %vm550, %v534, 0
        %vm689 = vcmask 1041408
        %v691 = vsel %vm689, %v547, 0
        %693 = vmatprep.subr.bf16.mxu0 0
        %694 = vmatpush1.bf16.msra.mxu0 0
        %695 = vmatprep.subr.bf16.mxu0 0
        %696 = vmatpush1.bf16.msra.mxu0 0
        %697 = vmatprep.subr.bf16.mxu0 0
        %698 = vmatpush1.bf16.msra.mxu0 0
        %699 = vmatprep.subr.bf16.mxu0 0
        %700 = vmatpush1.bf16.msra.mxu0 0
        %701 = vmatprep.subr.bf16.mxu0 0
        %702 = vmatpush1.bf16.msra.mxu0 0
        %703 = vmatprep.subr.bf16.mxu0 0
        %704 = vmatpush1.bf16.msra.mxu0 %v691
        %705 = vmatprep.subr.bf16.mxu0 0
        %706 = vmatpush1.bf16.msra.mxu0 %v546
        %707 = vmatprep.subr.bf16.mxu0 0
        %708 = vmatpush1.bf16.msra.mxu0 %v545
        %709 = vmatprep.subr.bf16.mxu0 0
        %710 = vmatpush2.bf16.msra.mxu0 0
        %711 = vmatprep.subr.bf16.mxu0 0
        %712 = vmatpush2.bf16.msra.mxu0 0
        %713 = vmatprep.subr.bf16.mxu0 0
        %714 = vmatpush2.bf16.msra.mxu0 0
        %715 = vmatprep.subr.bf16.mxu0 0
        %716 = vmatpush2.bf16.msra.mxu0 0
        %717 = vmatprep.subr.bf16.mxu0 0
        %718 = vmatpush2.bf16.msra.mxu0 0
        %719 = vmatprep.subr.bf16.mxu0 0
        %720 = vmatpush2.bf16.msra.mxu0 0
        %721 = vmatprep.subr.bf16.mxu0 0
        %722 = vmatpush2.bf16.msra.mxu0 0
        %723 = vmatprep.subr.bf16.mxu0 0
        %724 = vmatpush2.bf16.msra.mxu0 0
        %725 = vmatprep.mubr.bf16.mxu0 0
        %726 = vmatmul.mubr.bf16.gmra.mxu0 %v552
        %v727 = vpop.f32.mrf.mxu0
        %v728 = vadd.f32 %v303, %v727
        %v729 = vpop.f32.mrf.mxu0
        %v730 = vpop.f32.mrf.mxu0
        %v731 = vadd.f32 %v303, %v730
        %v732 = vpop.f32.mrf.mxu0
        %733 = vmatprep.mubr.bf16.mxu0 0
        %734 = vmatmul.mubr.bf16.gmra.mxu0 %v555
        %v735 = vpop.f32.mrf.mxu0
        %v736 = vadd.f32 %v303, %v735
        %v737 = vpop.f32.mrf.mxu0
        %v738 = vpop.f32.mrf.mxu0
        %v739 = vadd.f32 %v303, %v738
        %v740 = vpop.f32.mrf.mxu0
        %741 = vmatprep.mubr.bf16.mxu0 0
        %742 = vmatmul.mubr.bf16.gmra.mxu0 %v558
        %v743 = vpop.f32.mrf.mxu0
        %v744 = vadd.f32 %v303, %v743
        %v745 = vpop.f32.mrf.mxu0
        %v746 = vpop.f32.mrf.mxu0
        %v747 = vadd.f32 %v303, %v746
        %v748 = vpop.f32.mrf.mxu0
        %749 = vmatprep.mubr.bf16.mxu0 0
        %750 = vmatmul.mubr.bf16.gmra.mxu0 %v561
        %v751 = vpop.f32.mrf.mxu0
        %v752 = vadd.f32 %v303, %v751
        %v753 = vpop.f32.mrf.mxu0
        %v754 = vpop.f32.mrf.mxu0
        %v755 = vadd.f32 %v303, %v754
        %v756 = vpop.f32.mrf.mxu0
        %757 = vmatprep.mubr.bf16.mxu0 0
        %758 = vmatmul.mubr.bf16.gmra.mxu0 %v564
        %v759 = vpop.f32.mrf.mxu0
        %v760 = vadd.f32 %v303, %v759
        %v761 = vpop.f32.mrf.mxu0
        %v762 = vpop.f32.mrf.mxu0
        %v763 = vadd.f32 %v303, %v762
        %v764 = vpop.f32.mrf.mxu0
        %765 = vmatprep.mubr.bf16.mxu0 0
        %766 = vmatmul.mubr.bf16.gmra.mxu0 %v567
        %v767 = vpop.f32.mrf.mxu0
        %v768 = vadd.f32 %v303, %v767
        %v769 = vpop.f32.mrf.mxu0
        %v770 = vpop.f32.mrf.mxu0
        %v771 = vadd.f32 %v303, %v770
        %v772 = vpop.f32.mrf.mxu0
        %773 = vmatprep.mubr.bf16.mxu0 0
        %774 = vmatmul.mubr.bf16.gmra.mxu0 %v570
        %v775 = vpop.f32.mrf.mxu0
        %v776 = vadd.f32 %v303, %v775
        %v777 = vpop.f32.mrf.mxu0
        %v778 = vpop.f32.mrf.mxu0
        %v779 = vadd.f32 %v303, %v778
        %v780 = vpop.f32.mrf.mxu0
        %781 = vmatprep.mubr.bf16.mxu0 0
        %782 = vmatmul.mubr.bf16.gmra.mxu0 %v573
        %v783 = vpop.f32.mrf.mxu0
        %v784 = vadd.f32 %v303, %v783
        %v785 = vpop.f32.mrf.mxu0
        %v786 = vpop.f32.mrf.mxu0
        %v787 = vadd.f32 %v303, %v786
        %v788 = vpop.f32.mrf.mxu0
        %789 = vmatprep.mubr.bf16.mxu0 0
        %790 = vmatmul.mubr.bf16.gmra.mxu0 %v576
        %v791 = vpop.f32.mrf.mxu0
        %v792 = vadd.f32 %v303, %v791
        %v793 = vpop.f32.mrf.mxu0
        %v794 = vpop.f32.mrf.mxu0
        %v795 = vadd.f32 %v303, %v794
        %v796 = vpop.f32.mrf.mxu0
        %797 = vmatprep.mubr.bf16.mxu0 0
        %798 = vmatmul.mubr.bf16.gmra.mxu0 %v579
        %v799 = vpop.f32.mrf.mxu0
        %v800 = vadd.f32 %v303, %v799
        %v801 = vpop.f32.mrf.mxu0
        %v802 = vpop.f32.mrf.mxu0
        %v803 = vadd.f32 %v303, %v802
        %v804 = vpop.f32.mrf.mxu0
        %805 = vmatprep.mubr.bf16.mxu0 0
        %806 = vmatmul.mubr.bf16.gmra.mxu0 %v582
        %v807 = vpop.f32.mrf.mxu0
        %v808 = vadd.f32 %v303, %v807
        %v809 = vpop.f32.mrf.mxu0
        %v810 = vpop.f32.mrf.mxu0
        %v811 = vadd.f32 %v303, %v810
        %v812 = vpop.f32.mrf.mxu0
        %813 = vmatprep.mubr.bf16.mxu0 0
        %814 = vmatmul.mubr.bf16.gmra.mxu0 %v585
        %v815 = vpop.f32.mrf.mxu0
        %v816 = vadd.f32 %v303, %v815
        %v817 = vpop.f32.mrf.mxu0
        %v818 = vpop.f32.mrf.mxu0
        %v819 = vadd.f32 %v303, %v818
        %v820 = vpop.f32.mrf.mxu0
        %821 = vmatprep.mubr.bf16.mxu0 0
        %822 = vmatmul.mubr.bf16.gmra.mxu0 %v588
        %v823 = vpop.f32.mrf.mxu0
        %v824 = vadd.f32 %v303, %v823
        %v825 = vpop.f32.mrf.mxu0
        %v826 = vpop.f32.mrf.mxu0
        %v827 = vadd.f32 %v303, %v826
        %v828 = vpop.f32.mrf.mxu0
        %829 = vmatprep.mubr.bf16.mxu0 0
        %830 = vmatmul.mubr.bf16.gmra.mxu0 %v591
        %v831 = vpop.f32.mrf.mxu0
        %v832 = vadd.f32 %v303, %v831
        %v833 = vpop.f32.mrf.mxu0
        %v834 = vpop.f32.mrf.mxu0
        %v835 = vadd.f32 %v303, %v834
        %v836 = vpop.f32.mrf.mxu0
        %837 = vmatprep.mubr.bf16.mxu0 0
        %838 = vmatmul.mubr.bf16.gmra.mxu0 %v594
        %v839 = vpop.f32.mrf.mxu0
        %v840 = vadd.f32 %v303, %v839
        %v841 = vpop.f32.mrf.mxu0
        %v842 = vpop.f32.mrf.mxu0
        %v843 = vadd.f32 %v303, %v842
        %v844 = vpop.f32.mrf.mxu0
        %845 = vmatprep.mubr.bf16.mxu0 0
        %846 = vmatmul.mubr.bf16.gmra.mxu0 %v597
        %v847 = vpop.f32.mrf.mxu0
        %v848 = vadd.f32 %v303, %v847
        %v849 = vpop.f32.mrf.mxu0
        %v850 = vpop.f32.mrf.mxu0
        %v851 = vadd.f32 %v303, %v850
        %v852 = vpop.f32.mrf.mxu0
        %853 = vmatprep.mubr.bf16.mxu0 0
        %854 = vmatmul.mubr.bf16.gmra.mxu0 %v600
        %v855 = vpop.f32.mrf.mxu0
        %v856 = vadd.f32 %v303, %v855
        %v857 = vpop.f32.mrf.mxu0
        %v858 = vpop.f32.mrf.mxu0
        %v859 = vadd.f32 %v303, %v858
        %v860 = vpop.f32.mrf.mxu0
        %861 = vmatprep.mubr.bf16.mxu0 0
        %862 = vmatmul.mubr.bf16.gmra.mxu0 %v603
        %v863 = vpop.f32.mrf.mxu0
        %v864 = vadd.f32 %v303, %v863
        %v865 = vpop.f32.mrf.mxu0
        %v866 = vpop.f32.mrf.mxu0
        %v867 = vadd.f32 %v303, %v866
        %v868 = vpop.f32.mrf.mxu0
        %869 = vmatprep.mubr.bf16.mxu0 0
        %870 = vmatmul.mubr.bf16.gmra.mxu0 %v606
        %v871 = vpop.f32.mrf.mxu0
        %v872 = vadd.f32 %v303, %v871
        %v873 = vpop.f32.mrf.mxu0
        %v874 = vpop.f32.mrf.mxu0
        %v875 = vadd.f32 %v303, %v874
        %v876 = vpop.f32.mrf.mxu0
        %877 = vmatprep.mubr.bf16.mxu0 0
        %878 = vmatmul.mubr.bf16.gmra.mxu0 %v609
        %v879 = vpop.f32.mrf.mxu0
        %v880 = vadd.f32 %v303, %v879
        %v881 = vpop.f32.mrf.mxu0
        %v882 = vpop.f32.mrf.mxu0
        %v883 = vadd.f32 %v303, %v882
        %v884 = vpop.f32.mrf.mxu0
        %885 = vmatprep.mubr.bf16.mxu0 0
        %886 = vmatmul.mubr.bf16.gmra.mxu0 %v612
        %v887 = vpop.f32.mrf.mxu0
        %v888 = vadd.f32 %v303, %v887
        %v889 = vpop.f32.mrf.mxu0
        %v890 = vpop.f32.mrf.mxu0
        %v891 = vadd.f32 %v303, %v890
        %v892 = vpop.f32.mrf.mxu0
        %893 = vmatprep.mubr.bf16.mxu0 0
        %894 = vmatmul.mubr.bf16.gmra.mxu0 %v615
        %v895 = vpop.f32.mrf.mxu0
        %v896 = vadd.f32 %v303, %v895
        %v897 = vpop.f32.mrf.mxu0
        %v898 = vpop.f32.mrf.mxu0
        %v899 = vadd.f32 %v303, %v898
        %v900 = vpop.f32.mrf.mxu0
        %901 = vmatprep.mubr.bf16.mxu0 0
        %902 = vmatmul.mubr.bf16.gmra.mxu0 %v618
        %v903 = vpop.f32.mrf.mxu0
        %v904 = vadd.f32 %v303, %v903
        %v905 = vpop.f32.mrf.mxu0
        %v906 = vpop.f32.mrf.mxu0
        %v907 = vadd.f32 %v303, %v906
        %v908 = vpop.f32.mrf.mxu0
        %909 = vmatprep.mubr.bf16.mxu0 0
        %910 = vmatmul.mubr.bf16.gmra.mxu0 %v621
        %v911 = vpop.f32.mrf.mxu0
        %v912 = vadd.f32 %v303, %v911
        %v913 = vpop.f32.mrf.mxu0
        %v914 = vpop.f32.mrf.mxu0
        %v915 = vadd.f32 %v303, %v914
        %v916 = vpop.f32.mrf.mxu0
        %917 = vmatprep.mubr.bf16.mxu0 0
        %918 = vmatmul.mubr.bf16.gmra.mxu0 %v624
        %v919 = vpop.f32.mrf.mxu0
        %v920 = vadd.f32 %v303, %v919
        %v921 = vpop.f32.mrf.mxu0
        %v922 = vpop.f32.mrf.mxu0
        %v923 = vadd.f32 %v303, %v922
        %v924 = vpop.f32.mrf.mxu0
        %925 = vmatprep.mubr.bf16.mxu0 0
        %926 = vmatmul.mubr.bf16.gmra.mxu0 %v627
        %v927 = vpop.f32.mrf.mxu0
        %v928 = vadd.f32 %v303, %v927
        %v929 = vpop.f32.mrf.mxu0
        %v930 = vpop.f32.mrf.mxu0
        %v931 = vadd.f32 %v303, %v930
        %v932 = vpop.f32.mrf.mxu0
        %933 = vmatprep.mubr.bf16.mxu0 0
        %934 = vmatmul.mubr.bf16.gmra.mxu0 %v630
        %v935 = vpop.f32.mrf.mxu0
        %v936 = vadd.f32 %v303, %v935
        %v937 = vpop.f32.mrf.mxu0
        %v938 = vpop.f32.mrf.mxu0
        %v939 = vadd.f32 %v303, %v938
        %v940 = vpop.f32.mrf.mxu0
        %941 = vmatprep.mubr.bf16.mxu0 0
        %942 = vmatmul.mubr.bf16.gmra.mxu0 %v633
        %v943 = vpop.f32.mrf.mxu0
        %v944 = vadd.f32 %v303, %v943
        %v945 = vpop.f32.mrf.mxu0
        %v946 = vpop.f32.mrf.mxu0
        %v947 = vadd.f32 %v303, %v946
        %v948 = vpop.f32.mrf.mxu0
        %949 = vmatprep.mubr.bf16.mxu0 0
        %950 = vmatmul.mubr.bf16.gmra.mxu0 %v636
        %v951 = vpop.f32.mrf.mxu0
        %v952 = vadd.f32 %v303, %v951
        %v953 = vpop.f32.mrf.mxu0
        %v954 = vpop.f32.mrf.mxu0
        %v955 = vadd.f32 %v303, %v954
        %v956 = vpop.f32.mrf.mxu0
        %957 = vmatprep.mubr.bf16.mxu0 0
        %958 = vmatmul.mubr.bf16.gmra.mxu0 %v639
        %v959 = vpop.f32.mrf.mxu0
        %v960 = vadd.f32 %v303, %v959
        %v961 = vpop.f32.mrf.mxu0
        %v962 = vpop.f32.mrf.mxu0
        %v963 = vadd.f32 %v303, %v962
        %v964 = vpop.f32.mrf.mxu0
        %965 = vmatprep.mubr.bf16.mxu0 0
        %966 = vmatmul.mubr.bf16.gmra.mxu0 %v642
        %v967 = vpop.f32.mrf.mxu0
        %v968 = vadd.f32 %v303, %v967
        %v969 = vpop.f32.mrf.mxu0
        %v970 = vpop.f32.mrf.mxu0
        %v971 = vadd.f32 %v303, %v970
        %v972 = vpop.f32.mrf.mxu0
        %973 = vmatprep.mubr.bf16.mxu0 0
        %974 = vmatmul.mubr.bf16.gmra.mxu0 %v645
        %v975 = vpop.f32.mrf.mxu0
        %v976 = vadd.f32 %v303, %v975
        %v977 = vpop.f32.mrf.mxu0
        %v978 = vpop.f32.mrf.mxu0
        %v979 = vadd.f32 %v303, %v978
        %v980 = vpop.f32.mrf.mxu0
        %981 = vmatprep.mubr.bf16.mxu0 0
        %982 = vmatmul.mubr.bf16.gmra.mxu0 %v648
        %v983 = vpop.f32.mrf.mxu0
        %v984 = vadd.f32 %v303, %v983
        %v985 = vpop.f32.mrf.mxu0
        %v986 = vpop.f32.mrf.mxu0
        %v987 = vadd.f32 %v303, %v986
        %v988 = vpop.f32.mrf.mxu0
        %989 = vmatprep.mubr.bf16.mxu0 0
        %990 = vmatmul.mubr.bf16.gmra.mxu0 %v651
        %v991 = vpop.f32.mrf.mxu0
        %v992 = vadd.f32 %v303, %v991
        %v993 = vpop.f32.mrf.mxu0
        %v994 = vpop.f32.mrf.mxu0
        %v995 = vadd.f32 %v303, %v994
        %v996 = vpop.f32.mrf.mxu0
        %997 = vmatprep.mubr.bf16.mxu0 0
        %998 = vmatmul.mubr.bf16.gmra.mxu0 %v654
        %v999 = vpop.f32.mrf.mxu0
        %v1000 = vadd.f32 %v303, %v999
        %v1001 = vpop.f32.mrf.mxu0
        %v1002 = vpop.f32.mrf.mxu0
        %v1003 = vadd.f32 %v303, %v1002
        %v1004 = vpop.f32.mrf.mxu0
        %1005 = vmatprep.mubr.bf16.mxu0 0
        %1006 = vmatmul.mubr.bf16.gmra.mxu0 %v657
        %v1007 = vpop.f32.mrf.mxu0
        %v1008 = vadd.f32 %v303, %v1007
        %v1009 = vpop.f32.mrf.mxu0
        %v1010 = vpop.f32.mrf.mxu0
        %v1011 = vadd.f32 %v303, %v1010
        %v1012 = vpop.f32.mrf.mxu0
        %1013 = vmatprep.mubr.bf16.mxu0 0
        %1014 = vmatmul.mubr.bf16.gmra.mxu0 %v660
        %v1015 = vpop.f32.mrf.mxu0
        %v1016 = vadd.f32 %v303, %v1015
        %v1017 = vpop.f32.mrf.mxu0
        %v1018 = vpop.f32.mrf.mxu0
        %v1019 = vadd.f32 %v303, %v1018
        %v1020 = vpop.f32.mrf.mxu0
        %1021 = vmatprep.mubr.bf16.mxu0 0
        %1022 = vmatmul.mubr.bf16.gmra.mxu0 %v663
        %v1023 = vpop.f32.mrf.mxu0
        %v1024 = vadd.f32 %v303, %v1023
        %v1025 = vpop.f32.mrf.mxu0
        %v1026 = vpop.f32.mrf.mxu0
        %v1027 = vadd.f32 %v303, %v1026
        %v1028 = vpop.f32.mrf.mxu0
        %1029 = vmatprep.mubr.bf16.mxu0 0
        %1030 = vmatmul.mubr.bf16.gmra.mxu0 %v666
        %v1031 = vpop.f32.mrf.mxu0
        %v1032 = vadd.f32 %v303, %v1031
        %v1033 = vpop.f32.mrf.mxu0
        %v1034 = vpop.f32.mrf.mxu0
        %v1035 = vadd.f32 %v303, %v1034
        %v1036 = vpop.f32.mrf.mxu0
        %1037 = vmatprep.mubr.bf16.mxu0 0
        %1038 = vmatmul.mubr.bf16.gmra.mxu0 %v669
        %v1039 = vpop.f32.mrf.mxu0
        %v1040 = vadd.f32 %v303, %v1039
        %v1041 = vpop.f32.mrf.mxu0
        %v1042 = vpop.f32.mrf.mxu0
        %v1043 = vadd.f32 %v303, %v1042
        %v1044 = vpop.f32.mrf.mxu0
        %1045 = vmatprep.mubr.bf16.mxu0 0
        %1046 = vmatmul.mubr.bf16.gmra.mxu0 %v672
        %v1047 = vpop.f32.mrf.mxu0
        %v1048 = vadd.f32 %v303, %v1047
        %v1049 = vpop.f32.mrf.mxu0
        %v1050 = vpop.f32.mrf.mxu0
        %v1051 = vadd.f32 %v303, %v1050
        %v1052 = vpop.f32.mrf.mxu0
        %1053 = vmatprep.mubr.bf16.mxu0 0
        %1054 = vmatmul.mubr.bf16.gmra.mxu0 %v675
        %v1055 = vpop.f32.mrf.mxu0
        %v1056 = vadd.f32 %v303, %v1055
        %v1057 = vpop.f32.mrf.mxu0
        %v1058 = vpop.f32.mrf.mxu0
        %v1059 = vadd.f32 %v303, %v1058
        %v1060 = vpop.f32.mrf.mxu0
        %1061 = vmatprep.mubr.bf16.mxu0 0
        %1062 = vmatmul.mubr.bf16.gmra.mxu0 %v678
        %v1063 = vpop.f32.mrf.mxu0
        %v1064 = vadd.f32 %v303, %v1063
        %v1065 = vpop.f32.mrf.mxu0
        %v1066 = vpop.f32.mrf.mxu0
        %v1067 = vadd.f32 %v303, %v1066
        %v1068 = vpop.f32.mrf.mxu0
        %1069 = vmatprep.mubr.bf16.mxu0 0
        %1070 = vmatmul.mubr.bf16.gmra.mxu0 %v681
        %v1071 = vpop.f32.mrf.mxu0
        %v1072 = vadd.f32 %v303, %v1071
        %v1073 = vpop.f32.mrf.mxu0
        %v1074 = vpop.f32.mrf.mxu0
        %v1075 = vadd.f32 %v303, %v1074
        %v1076 = vpop.f32.mrf.mxu0
        %1077 = vmatprep.mubr.bf16.mxu0 0
        %1078 = vmatmul.mubr.bf16.gmra.mxu0 %v684
        %v1079 = vpop.f32.mrf.mxu0
        %v1080 = vadd.f32 %v303, %v1079
        %v1081 = vpop.f32.mrf.mxu0
        %v1082 = vpop.f32.mrf.mxu0
        %v1083 = vadd.f32 %v303, %v1082
        %v1084 = vpop.f32.mrf.mxu0
        %1085 = vmatprep.mubr.bf16.mxu0 0
        %1086 = vmatmul.mubr.bf16.gmra.mxu0 %v687
        %v1087 = vpop.f32.mrf.mxu0
        %v1088 = vadd.f32 %v303, %v1087
        %v1089 = vpop.f32.mrf.mxu0
        %v1090 = vpop.f32.mrf.mxu0
        %v1091 = vadd.f32 %v303, %v1090
        %v1092 = vpop.f32.mrf.mxu0
        %1093 = vdwg.mxu0
        %v1094 = vmax.f32 %v728, 0.0
        %v1095 = vmax.f32 %v731, 0.0
        %v1096 = vmax.f32 %v736, 0.0
        %v1097 = vmax.f32 %v739, 0.0
        %v1098 = vmax.f32 %v744, 0.0
        %v1099 = vmax.f32 %v747, 0.0
        %v1100 = vmax.f32 %v752, 0.0
        %v1101 = vmax.f32 %v755, 0.0
        %v1102 = vmax.f32 %v760, 0.0
        %v1103 = vmax.f32 %v763, 0.0
        %v1104 = vmax.f32 %v768, 0.0
        %v1105 = vmax.f32 %v771, 0.0
        %v1106 = vmax.f32 %v776, 0.0
        %v1107 = vmax.f32 %v779, 0.0
        %v1108 = vmax.f32 %v784, 0.0
        %v1109 = vmax.f32 %v787, 0.0
        %v1110 = vmax.f32 %v792, 0.0
        %v1111 = vmax.f32 %v795, 0.0
        %v1112 = vmax.f32 %v800, 0.0
        %v1113 = vmax.f32 %v803, 0.0
        %v1114 = vmax.f32 %v808, 0.0
        %v1115 = vmax.f32 %v811, 0.0
        %v1116 = vmax.f32 %v816, 0.0
        %v1117 = vmax.f32 %v819, 0.0
        %v1118 = vmax.f32 %v824, 0.0
        %v1119 = vmax.f32 %v827, 0.0
        %v1120 = vmax.f32 %v832, 0.0
        %v1121 = vmax.f32 %v835, 0.0
        %v1122 = vmax.f32 %v840, 0.0
        %v1123 = vmax.f32 %v843, 0.0
        %v1124 = vmax.f32 %v848, 0.0
        %v1125 = vmax.f32 %v851, 0.0
        %v1126 = vmax.f32 %v856, 0.0
        %v1127 = vmax.f32 %v859, 0.0
        %v1128 = vmax.f32 %v864, 0.0
        %v1129 = vmax.f32 %v867, 0.0
        %v1130 = vmax.f32 %v872, 0.0
        %v1131 = vmax.f32 %v875, 0.0
        %v1132 = vmax.f32 %v880, 0.0
        %v1133 = vmax.f32 %v883, 0.0
        %v1134 = vmax.f32 %v888, 0.0
        %v1135 = vmax.f32 %v891, 0.0
        %v1136 = vmax.f32 %v896, 0.0
        %v1137 = vmax.f32 %v899, 0.0
        %v1138 = vmax.f32 %v904, 0.0
        %v1139 = vmax.f32 %v907, 0.0
        %v1140 = vmax.f32 %v912, 0.0
        %v1141 = vmax.f32 %v915, 0.0
        %v1142 = vmax.f32 %v920, 0.0
        %v1143 = vmax.f32 %v923, 0.0
        %v1144 = vmax.f32 %v928, 0.0
        %v1145 = vmax.f32 %v931, 0.0
        %v1146 = vmax.f32 %v936, 0.0
        %v1147 = vmax.f32 %v939, 0.0
        %v1148 = vmax.f32 %v944, 0.0
        %v1149 = vmax.f32 %v947, 0.0
        %v1150 = vmax.f32 %v952, 0.0
        %v1151 = vmax.f32 %v955, 0.0
        %v1152 = vmax.f32 %v960, 0.0
        %v1153 = vmax.f32 %v963, 0.0
        %v1154 = vmax.f32 %v968, 0.0
        %v1155 = vmax.f32 %v971, 0.0
        %v1156 = vmax.f32 %v976, 0.0
        %v1157 = vmax.f32 %v979, 0.0
        %v1158 = vmax.f32 %v984, 0.0
        %v1159 = vmax.f32 %v987, 0.0
        %v1160 = vmax.f32 %v992, 0.0
        %v1161 = vmax.f32 %v995, 0.0
        %v1162 = vmax.f32 %v1000, 0.0
        %v1163 = vmax.f32 %v1003, 0.0
        %v1164 = vmax.f32 %v1008, 0.0
        %v1165 = vmax.f32 %v1011, 0.0
        %v1166 = vmax.f32 %v1016, 0.0
        %v1167 = vmax.f32 %v1019, 0.0
        %v1168 = vmax.f32 %v1024, 0.0
        %v1169 = vmax.f32 %v1027, 0.0
        %v1170 = vmax.f32 %v1032, 0.0
        %v1171 = vmax.f32 %v1035, 0.0
        %v1172 = vmax.f32 %v1040, 0.0
        %v1173 = vmax.f32 %v1043, 0.0
        %v1174 = vmax.f32 %v1048, 0.0
        %v1175 = vmax.f32 %v1051, 0.0
        %v1176 = vmax.f32 %v1056, 0.0
        %v1177 = vmax.f32 %v1059, 0.0
        %v1178 = vmax.f32 %v1064, 0.0
        %v1179 = vmax.f32 %v1067, 0.0
        %v1180 = vmax.f32 %v1072, 0.0
        %v1181 = vmax.f32 %v1075, 0.0
        %v1182 = vmax.f32 %v1080, 0.0
        %v1183 = vmax.f32 %v1083, 0.0
        %v1184 = vmax.f32 %v1088, 0.0
        %v1185 = vmax.f32 %v1091, 0.0
        %1186 = vst [vmem:[%s192] sm:$0xff] %v1094
        %1187 = vst [vmem:[%s192 + $0x8] sm:$0xff] %v1095
        %1188 = vst [vmem:[%s192 + $0x10] sm:$0xff] %v1096
        %1189 = vst [vmem:[%s192 + $0x18] sm:$0xff] %v1097
        %1190 = vst [vmem:[%s192 + $0x20] sm:$0xff] %v1098
        %1191 = vst [vmem:[%s192 + $0x28] sm:$0xff] %v1099
        %1192 = vst [vmem:[%s192 + $0x30] sm:$0xff] %v1100
        %1193 = vst [vmem:[%s192 + $0x38] sm:$0xff] %v1101
        %1194 = vst [vmem:[%s192 + $0x40] sm:$0xff] %v1102
        %1195 = vst [vmem:[%s192 + $0x48] sm:$0xff] %v1103
        %1196 = vst [vmem:[%s192 + $0x50] sm:$0xff] %v1104
        %1197 = vst [vmem:[%s192 + $0x58] sm:$0xff] %v1105
        %1198 = vst [vmem:[%s192 + $0x60] sm:$0xff] %v1106
        %1199 = vst [vmem:[%s192 + $0x68] sm:$0xff] %v1107
        %1200 = vst [vmem:[%s192 + $0x70] sm:$0xff] %v1108
        %1201 = vst [vmem:[%s192 + $0x78] sm:$0xff] %v1109
        %1202 = vst [vmem:[%s192 + $0x80] sm:$0xff] %v1110
        %1203 = vst [vmem:[%s192 + $0x88] sm:$0xff] %v1111
        %1204 = vst [vmem:[%s192 + $0x90] sm:$0xff] %v1112
        %1205 = vst [vmem:[%s192 + $0x98] sm:$0xff] %v1113
        %1206 = vst [vmem:[%s192 + $0xa0] sm:$0xff] %v1114
        %1207 = vst [vmem:[%s192 + $0xa8] sm:$0xff] %v1115
        %1208 = vst [vmem:[%s192 + $0xb0] sm:$0xff] %v1116
        %1209 = vst [vmem:[%s192 + $0xb8] sm:$0xff] %v1117
        %1210 = vst [vmem:[%s192 + $0xc0] sm:$0xff] %v1118
        %1211 = vst [vmem:[%s192 + $0xc8] sm:$0xff] %v1119
        %1212 = vst [vmem:[%s192 + $0xd0] sm:$0xff] %v1120
        %1213 = vst [vmem:[%s192 + $0xd8] sm:$0xff] %v1121
        %1214 = vst [vmem:[%s192 + $0xe0] sm:$0xff] %v1122
        %1215 = vst [vmem:[%s192 + $0xe8] sm:$0xff] %v1123
        %1216 = vst [vmem:[%s192 + $0xf0] sm:$0xff] %v1124
        %1217 = vst [vmem:[%s192 + $0xf8] sm:$0xff] %v1125
        %1218 = vst [vmem:[%s192 + $0x100] sm:$0xff] %v1126
        %1219 = vst [vmem:[%s192 + $0x108] sm:$0xff] %v1127
        %1220 = vst [vmem:[%s192 + $0x110] sm:$0xff] %v1128
        %1221 = vst [vmem:[%s192 + $0x118] sm:$0xff] %v1129
        %1222 = vst [vmem:[%s192 + $0x120] sm:$0xff] %v1130
        %1223 = vst [vmem:[%s192 + $0x128] sm:$0xff] %v1131
        %1224 = vst [vmem:[%s192 + $0x130] sm:$0xff] %v1132
        %1225 = vst [vmem:[%s192 + $0x138] sm:$0xff] %v1133
        %1226 = vst [vmem:[%s192 + $0x140] sm:$0xff] %v1134
        %1227 = vst [vmem:[%s192 + $0x148] sm:$0xff] %v1135
        %1228 = vst [vmem:[%s192 + $0x150] sm:$0xff] %v1136
        %1229 = vst [vmem:[%s192 + $0x158] sm:$0xff] %v1137
        %1230 = vst [vmem:[%s192 + $0x160] sm:$0xff] %v1138
        %1231 = vst [vmem:[%s192 + $0x168] sm:$0xff] %v1139
        %1232 = vst [vmem:[%s192 + $0x170] sm:$0xff] %v1140
        %1233 = vst [vmem:[%s192 + $0x178] sm:$0xff] %v1141
        %1234 = vst [vmem:[%s192 + $0x180] sm:$0xff] %v1142
        %1235 = vst [vmem:[%s192 + $0x188] sm:$0xff] %v1143
        %1236 = vst [vmem:[%s192 + $0x190] sm:$0xff] %v1144
        %1237 = vst [vmem:[%s192 + $0x198] sm:$0xff] %v1145
        %1238 = vst [vmem:[%s192 + $0x1a0] sm:$0xff] %v1146
        %1239 = vst [vmem:[%s192 + $0x1a8] sm:$0xff] %v1147
        %1240 = vst [vmem:[%s192 + $0x1b0] sm:$0xff] %v1148
        %1241 = vst [vmem:[%s192 + $0x1b8] sm:$0xff] %v1149
        %1242 = vst [vmem:[%s192 + $0x1c0] sm:$0xff] %v1150
        %1243 = vst [vmem:[%s192 + $0x1c8] sm:$0xff] %v1151
        %1244 = vst [vmem:[%s192 + $0x1d0] sm:$0xff] %v1152
        %1245 = vst [vmem:[%s192 + $0x1d8] sm:$0xff] %v1153
        %1246 = vst [vmem:[%s192 + $0x1e0] sm:$0xff] %v1154
        %1247 = vst [vmem:[%s192 + $0x1e8] sm:$0xff] %v1155
        %1248 = vst [vmem:[%s192 + $0x1f0] sm:$0xff] %v1156
        %1249 = vst [vmem:[%s192 + $0x1f8] sm:$0xff] %v1157
        %1250 = vst [vmem:[%s192 + $0x200] sm:$0xff] %v1158
        %1251 = vst [vmem:[%s192 + $0x208] sm:$0xff] %v1159
        %1252 = vst [vmem:[%s192 + $0x210] sm:$0xff] %v1160
        %1253 = vst [vmem:[%s192 + $0x218] sm:$0xff] %v1161
        %1254 = vst [vmem:[%s192 + $0x220] sm:$0xff] %v1162
        %1255 = vst [vmem:[%s192 + $0x228] sm:$0xff] %v1163
        %1256 = vst [vmem:[%s192 + $0x230] sm:$0xff] %v1164
        %1257 = vst [vmem:[%s192 + $0x238] sm:$0xff] %v1165
        %1258 = vst [vmem:[%s192 + $0x240] sm:$0xff] %v1166
        %1259 = vst [vmem:[%s192 + $0x248] sm:$0xff] %v1167
        %1260 = vst [vmem:[%s192 + $0x250] sm:$0xff] %v1168
        %1261 = vst [vmem:[%s192 + $0x258] sm:$0xff] %v1169
        %1262 = vst [vmem:[%s192 + $0x260] sm:$0xff] %v1170
        %1263 = vst [vmem:[%s192 + $0x268] sm:$0xff] %v1171
        %1264 = vst [vmem:[%s192 + $0x270] sm:$0xff] %v1172
        %1265 = vst [vmem:[%s192 + $0x278] sm:$0xff] %v1173
        %1266 = vst [vmem:[%s192 + $0x280] sm:$0xff] %v1174
        %1267 = vst [vmem:[%s192 + $0x288] sm:$0xff] %v1175
        %1268 = vst [vmem:[%s192 + $0x290] sm:$0xff] %v1176
        %1269 = vst [vmem:[%s192 + $0x298] sm:$0xff] %v1177
        %1270 = vst [vmem:[%s192 + $0x2a0] sm:$0xff] %v1178
        %1271 = vst [vmem:[%s192 + $0x2a8] sm:$0xff] %v1179
        %1272 = vst [vmem:[%s192 + $0x2b0] sm:$0xff] %v1180
        %1273 = vst [vmem:[%s192 + $0x2b8] sm:$0xff] %v1181
        %1274 = vst [vmem:[%s192 + $0x2c0] sm:$0xff] %v1182
        %1275 = vst [vmem:[%s192 + $0x2c8] sm:$0xff] %v1183
        %1276 = vst [vmem:[%s192 + $0x2d0] sm:$0xff] %v1184
        %1277 = vst [vmem:[%s192 + $0x2d8] sm:$0xff] %v1185
        %s1278 = sand.u32 %s95, 1
        %s1279 = scalar_lea.sflag [#allocation4], %s1278
        %s1280 = sand.u32 %s95, 1
        %s1281 = smul.addr %s1280, 736
        %s1282 = scalar_lea.vmem [#allocation7], %s1281
        // Predicated region
        $region41: #{tpu_custom_call.1} parent=31 // pred_check
          %p1283 = pneg %p105
        $region42: #{tpu_custom_call.1} parent=31 // pred_check_branch
          %1285 = sbr.rel (%p1283) target = $region44
        $region43: #{tpu_custom_call.1} parent=31 // pred_region
          %s1286 = smul.u32 92, %s19
          %s1288 = ssub.s32 11776, 11776
          %1289 = vsyncadd %s1279, %s1288
          %s1290 = smul.addr %s1286, 128
          %s1291 = scalar_lea.hbm %s3, %s1290
          %s1292 = sshll.u32 %s1282, 4
          %s1293 = int_to_ptr.vmem [resolvable:$true] %s1292
          %1298 = dma.vmem_to_hbm [thread:$0]  %s1293, 11776, %s1291, %s1279, 128, 128, 8
        $region44: #{tpu_custom_call.1} parent=31 // pred_fallthru
          _
      $region32: #{tpu_custom_call.1} parent=5 // pred_fallthru
        _
      %p1299 = scmp.le.s32.totalorder 2, %s14
      // Predicated region
      $region45: #{tpu_custom_call.1} parent=5 // pred_check
        %p1300 = pneg %p1299
      $region46: #{tpu_custom_call.1} parent=5 // pred_check_branch
        %1302 = sbr.rel (%p1300) target = $region48
      $region47: #{tpu_custom_call.1} parent=5 // pred_region
        %s1303 = ssub.s32 %s14, 2
        // Predicated region
        $region49: #{tpu_custom_call.1} parent=47 // pred_check
          %p1304 = pneg %p111
        $region50: #{tpu_custom_call.1} parent=47 // pred_check_branch
          %1306 = sbr.rel (%p1304) target = $region52
        $region51: #{tpu_custom_call.1} parent=47 // pred_region
          %s1307 = sand.u32 %s96, 1
          %s1308 = scalar_lea.sflag [#allocation4], %s1307
          %s1309 = sand.u32 %s96, 1
          %s1310 = smul.addr %s1309, 736
          %s1311 = scalar_lea.vmem [#allocation7], %s1310
          %1312 = dma.done %s1308, 11776
        $region52: #{tpu_custom_call.1} parent=47 // pred_fallthru
          _
      $region48: #{tpu_custom_call.1} parent=5 // pred_fallthru
        _
    $region6: #{tpu_custom_call.1} parent=1 // loop_footer
      %s18 = sadd.s32 1, %s14
    $region7: #{tpu_custom_call.1} parent=1 // loop_footer_branch
      %13 = sbr.rel target = $region3
    $region8: #{tpu_custom_call.1} parent=1 // loop_exit
      _
    %1313 = vsyncpa [#allocation3], 1
    %s1314 = scalar_lea.sflag [#allocation3], 1
    %1315 = vsyncpa %s1314, 1
    %1316 = vsyncpa [#allocation6], 1
    %1317 = vsyncpa [#allocation4], 1
    %s1318 = scalar_lea.sflag [#allocation4], 1
    %1319 = vsyncpa %s1318, 1

</llo_original>
